<compile_context>
chip_gen: v7x
topology: tpu7x:2x2x1
jax: 0.10.0
libtpu: 0.0.40
codegen_flags: <defaults>
</compile_context>

<pallas_src>
import functools

import jax
import jax.numpy as jnp
import numpy as np
from jax.experimental import pallas as pl
from jax.experimental.pallas import tpu as pltpu

# ----------------------------- hyper-params ---------------------------------
K_SORT = 7          # SortAggregation k
NUM_LAYERS = 3      # => conv1 + 2 extra SAGEConvs, conv1d kernel_size = 3
HIDDEN = 32
NUM_FEATURES = 8
NUM_CLASSES = 5
CONV1D_OUT = 32
N_WINDOWS = K_SORT - NUM_LAYERS + 1
DROPOUT = 0.1       # eval mode => identity

_VMEM = pl.BlockSpec(memory_space=pltpu.MemorySpace.VMEM)


# ----------------- fused SAGEConv x3 + ReLU (single pallas_call) -------------
def _fused_sage_kernel(a_ref, x_ref, wl_ref, wr_ref, bl_ref, o_ref):
    # a_ref: [N, N] row-normalized adjacency, x_ref: [N, H] (F zero-padded to H)
    # wl_ref/wr_ref: [L, H, H], bl_ref: [L, 1, H]
    a = a_ref[...]
    h = x_ref[...]
    for layer in range(NUM_LAYERS):                     # unrolled, L = 3
        agg = jnp.dot(a, h, preferred_element_type=jnp.float32)
        h = (jnp.dot(agg, wl_ref[layer], preferred_element_type=jnp.float32)
             + jnp.dot(h, wr_ref[layer], preferred_element_type=jnp.float32)
             + bl_ref[layer])
        h = jnp.maximum(h, 0.0)
    o_ref[...] = h


def fused_sage_relu(adj, x_pad, wl_stack, wr_stack, bl_stack):
    n = x_pad.shape[0]
    return pl.pallas_call(
        _fused_sage_kernel,
        out_shape=jax.ShapeDtypeStruct((n, HIDDEN), jnp.float32),
        in_specs=[_VMEM] * 5,
        out_specs=_VMEM,
    )(adj, x_pad, wl_stack, wr_stack, bl_stack)


# --------- Conv1d(block-Toeplitz) + Lin1 + Lin2 + log_softmax head -----------
def _head_kernel(pooled_ref, wt_ref, w1_ref, w2_ref, bias_ref, o_ref):
    # Conv1d over the window axis == pooled [B, k*H] @ block-Toeplitz [k*H, nw*32].
    conv = jnp.dot(pooled_ref[...], wt_ref[...],
                   preferred_element_type=jnp.float32) + bias_ref[0:1, :]
    conv = jnp.maximum(conv, 0.0)
    # Linear(32*nw -> H) with weight permuted host-side to [(t, o), h] order.
    h1 = jnp.dot(conv, w1_ref[...],
                 preferred_element_type=jnp.float32) + bias_ref[1:2, :HIDDEN]
    h1 = jnp.maximum(h1, 0.0)
    # F.dropout(p=0.1) is identity in eval mode.
    z = (jnp.dot(h1, w2_ref[...], preferred_element_type=jnp.float32)
         + bias_ref[2:3, :NUM_CLASSES])
    z = z - jnp.max(z, axis=-1, keepdims=True)
    o_ref[...] = z - jnp.log(jnp.sum(jnp.exp(z), axis=-1, keepdims=True))


def sortpool_head(pooled, w_toep, w1_perm, w2_t, biases):
    b = pooled.shape[0]
    return pl.pallas_call(
        _head_kernel,
        out_shape=jax.ShapeDtypeStruct((b, NUM_CLASSES), jnp.float32),
        in_specs=[_VMEM] * 5,
        out_specs=_VMEM,
    )(pooled, w_toep, w1_perm, w2_t, biases)


# ------------------------- SortAggregation (JAX glue) ------------------------
# TODO(synk): per-graph scatter + top-k has no clean Pallas/TPU equivalent at
# this scale; kept in JAX (fused into the jitted forward), using lax.top_k
# (k=7 selection) instead of a full argsort and an explicit validity mask.
def sort_aggregation(x, batch, num_graphs, max_nodes, k):
    n, d = x.shape
    counts = jnp.zeros((num_graphs,), jnp.int32).at[batch].add(1)
    starts = jnp.concatenate(
        [jnp.zeros((1,), jnp.int32), jnp.cumsum(counts)[:-1].astype(jnp.int32)])
    pos = jnp.arange(n, dtype=jnp.int32) - starts[batch]
    dense = jnp.zeros((num_graphs, max_nodes, d), dtype=x.dtype)
    dense = dense.at[batch, pos].set(x)

    # sort key = last feature channel, descending; padded slots -> -inf
    valid = jnp.arange(max_nodes, dtype=jnp.int32)[None, :] < counts[:, None]
    key = jnp.where(valid, dense[:, :, -1], -jnp.inf)
    kk = min(k, max_nodes)
    _, idx = jax.lax.top_k(key, kk)                        # [B, kk], descending
    topk = jnp.take_along_axis(dense, idx[:, :, None], axis=1)  # [B, kk, d]

    # zero rows beyond the per-graph node count (PyG zero-fills missing nodes)
    keep = jnp.arange(kk, dtype=jnp.int32)[None, :] < counts[:, None]
    topk = jnp.where(keep[:, :, None], topk, 0.0)
    if kk < k:
        topk = jnp.concatenate(
            [topk, jnp.zeros((num_graphs, k - kk, d), x.dtype)], axis=1)
    return topk.reshape(num_graphs, k * d)                 # [B, k*H], channel-last


# ------------------------------ full forward ---------------------------------
@functools.partial(jax.jit, static_argnums=(4, 5))
def sortpool_forward(params, x, adj, batch, num_graphs, max_nodes):
    n = x.shape[0]
    x_pad = jnp.zeros((n, HIDDEN), jnp.float32).at[:, :NUM_FEATURES].set(x)
    h = fused_sage_relu(adj, x_pad, params["wl"], params["wr"], params["bl"])
    pooled = sort_aggregation(h, batch, num_graphs, max_nodes, K_SORT)
    return sortpool_head(pooled, params["w_toep"], params["w1_perm"],
                         params["w2_t"], params["biases"])


# ------------------------------- param setup ---------------------------------
def init_params(key):
    ks = NUM_LAYERS
    nw = N_WINDOWS
    rng = np.random.default_rng(int(jax.random.randint(key, (), 0, 2**31 - 1)))
    scale = 0.1

    def nrm(shape):
        return (scale * rng.standard_normal(shape)).astype(np.float32)

    # SAGEConv stack; first layer's [F,H] weights zero-padded to [H,H] so all
    # layers share the fused kernel's [L,H,H] weight stack.
    wl1 = np.zeros((HIDDEN, HIDDEN), np.float32)
    wl1[:NUM_FEATURES] = nrm((NUM_FEATURES, HIDDEN))
    wr1 = np.zeros((HIDDEN, HIDDEN), np.float32)
    wr1[:NUM_FEATURES] = nrm((NUM_FEATURES, HIDDEN))
    wls, wrs, bls = [wl1], [wr1], [nrm((1, HIDDEN))]
    for _ in range(NUM_LAYERS - 1):
        wls.append(nrm((HIDDEN, HIDDEN)))
        wrs.append(nrm((HIDDEN, HIDDEN)))
        bls.append(nrm((1, HIDDEN)))
    params = {"wl": jnp.asarray(np.stack(wls)),
              "wr": jnp.asarray(np.stack(wrs)),
              "bl": jnp.asarray(np.stack(bls))}

    # Conv1d(H, 32, ks) weight [32, H, ks] -> block-Toeplitz [k*H, nw*32]:
    #   W_toep[(t+j)*H + c, t*32 + o] = wc[o, c, j]
    wc = nrm((CONV1D_OUT, HIDDEN, ks))
    bc = nrm((1, CONV1D_OUT))
    w_toep = np.zeros((K_SORT * HIDDEN, nw * CONV1D_OUT), np.float32)
    for t in range(nw):
        for j in range(ks):
            w_toep[(t + j) * HIDDEN:(t + j + 1) * HIDDEN,
                   t * CONV1D_OUT:(t + 1) * CONV1D_OUT] = wc[:, :, j].T
    params["w_toep"] = jnp.asarray(w_toep)

    # Linear(32*nw, H): PyTorch weight [H, 32*nw] (in-index = o*nw + t)
    # permuted to the conv-output layout [(t*32 + o), h].
    w1 = nrm((HIDDEN, CONV1D_OUT * nw))
    b1 = nrm((1, HIDDEN))
    params["w1_perm"] = jnp.asarray(
        w1.reshape(HIDDEN, CONV1D_OUT, nw).transpose(2, 1, 0)
        .reshape(nw * CONV1D_OUT, HIDDEN))

    # Linear(H, C): weight [C, H] -> [H, C]
    w2 = nrm((NUM_CLASSES, HIDDEN))
    b2 = nrm((1, NUM_CLASSES))
    params["w2_t"] = jnp.asarray(w2.T.copy())

    # packed head biases: row0 = conv bias tiled over windows (nw*32 lanes),
    # row1[:H] = lin1 bias, row2[:C] = lin2 bias
    biases = np.zeros((3, nw * CONV1D_OUT), np.float32)
    biases[0] = np.tile(bc, (1, nw))[0]
    biases[1, :HIDDEN] = b1[0]
    biases[2, :NUM_CLASSES] = b2[0]
    params["biases"] = jnp.asarray(biases)
    return params


# ------------------------------ synthetic data -------------------------------
def make_graph_batch(key, nodes_per_graph=6, num_graphs=2):
    n = nodes_per_graph * num_graphs
    x = jax.random.normal(key, (n, NUM_FEATURES), dtype=jnp.float32)
    # undirected ring within each graph
    src, dst = [], []
    for g in range(num_graphs):
        off = g * nodes_per_graph
        for i in range(nodes_per_graph):
            j = (i + 1) % nodes_per_graph
            src += [off + i, off + j]
            dst += [off + j, off + i]
    edge_index = np.stack([np.array(src, np.int32), np.array(dst, np.int32)])
    batch = np.repeat(np.arange(num_graphs, dtype=np.int32), nodes_per_graph)
    # dense row-normalized adjacency: A[i, j] = 1/deg(i) for edge j -> i
    adj = np.zeros((n, n), np.float32)
    adj[edge_index[1], edge_index[0]] += 1.0
    deg = np.maximum(adj.sum(axis=1, keepdims=True), 1.0)
    adj = adj / deg
    return (jnp.asarray(x), jnp.asarray(edge_index), jnp.asarray(batch),
            jnp.asarray(adj), num_graphs, nodes_per_graph)


# ----------------------------------- main ------------------------------------
if __name__ == "__main__":
    root = jax.random.PRNGKey(0)
    k_data, k_param = jax.random.split(root)

    x, edge_index, batch, adj, num_graphs, max_nodes = make_graph_batch(k_data)
    params = init_params(k_param)

    out = sortpool_forward(params, x, adj, batch, num_graphs, max_nodes)
    out = jax.block_until_ready(out)

    assert out.shape == (num_graphs, NUM_CLASSES)
    # log_softmax rows should sum to ~1 in prob space
    assert bool(jnp.all(jnp.isfinite(out)))
    assert bool(jnp.allclose(jnp.sum(jnp.exp(out), axis=-1), 1.0, atol=1e-4))
    print("KERNEL_OK")
</pallas_src>

<mosaic_0001>
module attributes {stable_mosaic.version = 11 : i64} {
  func.func @_fused_sage_kernel(%arg0: memref<12x12xf32, #tpu.memory_space<vmem>>, %arg1: memref<12x32xf32, #tpu.memory_space<vmem>>, %arg2: memref<3x32x32xf32, #tpu.memory_space<vmem>>, %arg3: memref<3x32x32xf32, #tpu.memory_space<vmem>>, %arg4: memref<3x1x32xf32, #tpu.memory_space<vmem>>, %arg5: memref<12x32xf32, #tpu.memory_space<vmem>>) attributes {dimension_semantics = [], scalar_prefetch = 0 : i64, scratch_operands = 0 : i64, tpu.core_type = #tpu.core_type<tc>} {
    %c0 = arith.constant 0 : index
    %c0_0 = arith.constant 0 : index
    %0 = vector.load %arg0[%c0, %c0_0] : memref<12x12xf32, #tpu.memory_space<vmem>>, vector<12x12xf32>
    %c0_1 = arith.constant 0 : index
    %c0_2 = arith.constant 0 : index
    %1 = vector.load %arg1[%c0_1, %c0_2] : memref<12x32xf32, #tpu.memory_space<vmem>>, vector<12x32xf32>
    %cst = arith.constant dense<0.000000e+00> : vector<12x32xf32>
    %2 = tpu.matmul %0, %1, %cst {dimension_numbers = #tpu.dot_dimension_numbers<[1], [0], [0], [1], [0, 0, 1, 1], [], []>} : vector<12x12xf32>, vector<12x32xf32>, vector<12x32xf32> -> vector<12x32xf32>
    %c0_3 = arith.constant 0 : index
    %c0_4 = arith.constant 0 : index
    %c0_5 = arith.constant 0 : index
    %3 = vector.load %arg2[%c0_3, %c0_4, %c0_5] : memref<3x32x32xf32, #tpu.memory_space<vmem>>, vector<1x32x32xf32>
    %4 = vector.shape_cast %3 : vector<1x32x32xf32> to vector<32x32xf32>
    %cst_6 = arith.constant dense<0.000000e+00> : vector<12x32xf32>
    %5 = tpu.matmul %2, %4, %cst_6 {dimension_numbers = #tpu.dot_dimension_numbers<[1], [0], [0], [1], [0, 0, 1, 1], [], []>} : vector<12x32xf32>, vector<32x32xf32>, vector<12x32xf32> -> vector<12x32xf32>
    %c0_7 = arith.constant 0 : index
    %c0_8 = arith.constant 0 : index
    %c0_9 = arith.constant 0 : index
    %6 = vector.load %arg3[%c0_7, %c0_8, %c0_9] : memref<3x32x32xf32, #tpu.memory_space<vmem>>, vector<1x32x32xf32>
    %7 = vector.shape_cast %6 : vector<1x32x32xf32> to vector<32x32xf32>
    %cst_10 = arith.constant dense<0.000000e+00> : vector<12x32xf32>
    %8 = tpu.matmul %1, %7, %cst_10 {dimension_numbers = #tpu.dot_dimension_numbers<[1], [0], [0], [1], [0, 0, 1, 1], [], []>} : vector<12x32xf32>, vector<32x32xf32>, vector<12x32xf32> -> vector<12x32xf32>
    %9 = arith.addf %5, %8 : vector<12x32xf32>
    %c0_11 = arith.constant 0 : index
    %c0_12 = arith.constant 0 : index
    %c0_13 = arith.constant 0 : index
    %10 = vector.load %arg4[%c0_11, %c0_12, %c0_13] : memref<3x1x32xf32, #tpu.memory_space<vmem>>, vector<1x1x32xf32>
    %11 = vector.shape_cast %10 : vector<1x1x32xf32> to vector<1x32xf32>
    %12 = vector.broadcast %11 : vector<1x32xf32> to vector<12x32xf32>
    %13 = arith.addf %9, %12 : vector<12x32xf32>
    %cst_14 = arith.constant 0.000000e+00 : f32
    %14 = vector.broadcast %cst_14 : f32 to vector<12x32xf32>
    %15 = arith.maximumf %13, %14 : vector<12x32xf32>
    %cst_15 = arith.constant dense<0.000000e+00> : vector<12x32xf32>
    %16 = tpu.matmul %0, %15, %cst_15 {dimension_numbers = #tpu.dot_dimension_numbers<[1], [0], [0], [1], [0, 0, 1, 1], [], []>} : vector<12x12xf32>, vector<12x32xf32>, vector<12x32xf32> -> vector<12x32xf32>
    %c1 = arith.constant 1 : index
    %c0_16 = arith.constant 0 : index
    %c0_17 = arith.constant 0 : index
    %17 = vector.load %arg2[%c1, %c0_16, %c0_17] : memref<3x32x32xf32, #tpu.memory_space<vmem>>, vector<1x32x32xf32>
    %18 = vector.shape_cast %17 : vector<1x32x32xf32> to vector<32x32xf32>
    %cst_18 = arith.constant dense<0.000000e+00> : vector<12x32xf32>
    %19 = tpu.matmul %16, %18, %cst_18 {dimension_numbers = #tpu.dot_dimension_numbers<[1], [0], [0], [1], [0, 0, 1, 1], [], []>} : vector<12x32xf32>, vector<32x32xf32>, vector<12x32xf32> -> vector<12x32xf32>
    %c1_19 = arith.constant 1 : index
    %c0_20 = arith.constant 0 : index
    %c0_21 = arith.constant 0 : index
    %20 = vector.load %arg3[%c1_19, %c0_20, %c0_21] : memref<3x32x32xf32, #tpu.memory_space<vmem>>, vector<1x32x32xf32>
    %21 = vector.shape_cast %20 : vector<1x32x32xf32> to vector<32x32xf32>
    %cst_22 = arith.constant dense<0.000000e+00> : vector<12x32xf32>
    %22 = tpu.matmul %15, %21, %cst_22 {dimension_numbers = #tpu.dot_dimension_numbers<[1], [0], [0], [1], [0, 0, 1, 1], [], []>} : vector<12x32xf32>, vector<32x32xf32>, vector<12x32xf32> -> vector<12x32xf32>
    %23 = arith.addf %19, %22 : vector<12x32xf32>
    %c1_23 = arith.constant 1 : index
    %c0_24 = arith.constant 0 : index
    %c0_25 = arith.constant 0 : index
    %24 = vector.load %arg4[%c1_23, %c0_24, %c0_25] : memref<3x1x32xf32, #tpu.memory_space<vmem>>, vector<1x1x32xf32>
    %25 = vector.shape_cast %24 : vector<1x1x32xf32> to vector<1x32xf32>
    %26 = vector.broadcast %25 : vector<1x32xf32> to vector<12x32xf32>
    %27 = arith.addf %23, %26 : vector<12x32xf32>
    %cst_26 = arith.constant 0.000000e+00 : f32
    %28 = vector.broadcast %cst_26 : f32 to vector<12x32xf32>
    %29 = arith.maximumf %27, %28 : vector<12x32xf32>
    %cst_27 = arith.constant dense<0.000000e+00> : vector<12x32xf32>
    %30 = tpu.matmul %0, %29, %cst_27 {dimension_numbers = #tpu.dot_dimension_numbers<[1], [0], [0], [1], [0, 0, 1, 1], [], []>} : vector<12x12xf32>, vector<12x32xf32>, vector<12x32xf32> -> vector<12x32xf32>
    %c2 = arith.constant 2 : index
    %c0_28 = arith.constant 0 : index
    %c0_29 = arith.constant 0 : index
    %31 = vector.load %arg2[%c2, %c0_28, %c0_29] : memref<3x32x32xf32, #tpu.memory_space<vmem>>, vector<1x32x32xf32>
    %32 = vector.shape_cast %31 : vector<1x32x32xf32> to vector<32x32xf32>
    %cst_30 = arith.constant dense<0.000000e+00> : vector<12x32xf32>
    %33 = tpu.matmul %30, %32, %cst_30 {dimension_numbers = #tpu.dot_dimension_numbers<[1], [0], [0], [1], [0, 0, 1, 1], [], []>} : vector<12x32xf32>, vector<32x32xf32>, vector<12x32xf32> -> vector<12x32xf32>
    %c2_31 = arith.constant 2 : index
    %c0_32 = arith.constant 0 : index
    %c0_33 = arith.constant 0 : index
    %34 = vector.load %arg3[%c2_31, %c0_32, %c0_33] : memref<3x32x32xf32, #tpu.memory_space<vmem>>, vector<1x32x32xf32>
    %35 = vector.shape_cast %34 : vector<1x32x32xf32> to vector<32x32xf32>
    %cst_34 = arith.constant dense<0.000000e+00> : vector<12x32xf32>
    %36 = tpu.matmul %29, %35, %cst_34 {dimension_numbers = #tpu.dot_dimension_numbers<[1], [0], [0], [1], [0, 0, 1, 1], [], []>} : vector<12x32xf32>, vector<32x32xf32>, vector<12x32xf32> -> vector<12x32xf32>
    %37 = arith.addf %33, %36 : vector<12x32xf32>
    %c2_35 = arith.constant 2 : index
    %c0_36 = arith.constant 0 : index
    %c0_37 = arith.constant 0 : index
    %38 = vector.load %arg4[%c2_35, %c0_36, %c0_37] : memref<3x1x32xf32, #tpu.memory_space<vmem>>, vector<1x1x32xf32>
    %39 = vector.shape_cast %38 : vector<1x1x32xf32> to vector<1x32xf32>
    %40 = vector.broadcast %39 : vector<1x32xf32> to vector<12x32xf32>
    %41 = arith.addf %37, %40 : vector<12x32xf32>
    %cst_38 = arith.constant 0.000000e+00 : f32
    %42 = vector.broadcast %cst_38 : f32 to vector<12x32xf32>
    %43 = arith.maximumf %41, %42 : vector<12x32xf32>
    %c0_39 = arith.constant 0 : index
    %c0_40 = arith.constant 0 : index
    %44 = vector.load %arg5[%c0_39, %c0_40] : memref<12x32xf32, #tpu.memory_space<vmem>>, vector<12x32xf32>
    tpu.vector_store %arg5[%c0_39, %c0_40], %43 {strides = array<i32>} : memref<12x32xf32, #tpu.memory_space<vmem>>, vector<12x32xf32>,
    return
  }
}

module attributes {stable_mosaic.version = 11 : i64} {
  func.func @_head_kernel(%arg0: memref<2x224xf32, #tpu.memory_space<vmem>>, %arg1: memref<224x160xf32, #tpu.memory_space<vmem>>, %arg2: memref<160x32xf32, #tpu.memory_space<vmem>>, %arg3: memref<32x5xf32, #tpu.memory_space<vmem>>, %arg4: memref<3x160xf32, #tpu.memory_space<vmem>>, %arg5: memref<2x5xf32, #tpu.memory_space<vmem>>) attributes {dimension_semantics = [], scalar_prefetch = 0 : i64, scratch_operands = 0 : i64, tpu.core_type = #tpu.core_type<tc>} {
    %c0 = arith.constant 0 : index
    %c0_0 = arith.constant 0 : index
    %0 = vector.load %arg0[%c0, %c0_0] : memref<2x224xf32, #tpu.memory_space<vmem>>, vector<2x224xf32>
    %c0_1 = arith.constant 0 : index
    %c0_2 = arith.constant 0 : index
    %1 = vector.load %arg1[%c0_1, %c0_2] : memref<224x160xf32, #tpu.memory_space<vmem>>, vector<224x160xf32>
    %cst = arith.constant dense<0.000000e+00> : vector<2x160xf32>
    %2 = tpu.matmul %0, %1, %cst {dimension_numbers = #tpu.dot_dimension_numbers<[1], [0], [0], [1], [0, 0, 1, 1], [], []>} : vector<2x224xf32>, vector<224x160xf32>, vector<2x160xf32> -> vector<2x160xf32>
    %c0_3 = arith.constant 0 : index
    %c0_4 = arith.constant 0 : index
    %3 = vector.load %arg4[%c0_3, %c0_4] : memref<3x160xf32, #tpu.memory_space<vmem>>, vector<1x160xf32>
    %4 = vector.broadcast %3 : vector<1x160xf32> to vector<2x160xf32>
    %5 = arith.addf %2, %4 : vector<2x160xf32>
    %cst_5 = arith.constant 0.000000e+00 : f32
    %6 = vector.broadcast %cst_5 : f32 to vector<2x160xf32>
    %7 = arith.maximumf %5, %6 : vector<2x160xf32>
    %c0_6 = arith.constant 0 : index
    %c0_7 = arith.constant 0 : index
    %8 = vector.load %arg2[%c0_6, %c0_7] : memref<160x32xf32, #tpu.memory_space<vmem>>, vector<160x32xf32>
    %cst_8 = arith.constant dense<0.000000e+00> : vector<2x32xf32>
    %9 = tpu.matmul %7, %8, %cst_8 {dimension_numbers = #tpu.dot_dimension_numbers<[1], [0], [0], [1], [0, 0, 1, 1], [], []>} : vector<2x160xf32>, vector<160x32xf32>, vector<2x32xf32> -> vector<2x32xf32>
    %c1 = arith.constant 1 : index
    %c0_9 = arith.constant 0 : index
    %10 = vector.load %arg4[%c1, %c0_9] : memref<3x160xf32, #tpu.memory_space<vmem>>, vector<1x32xf32>
    %11 = vector.broadcast %10 : vector<1x32xf32> to vector<2x32xf32>
    %12 = arith.addf %9, %11 : vector<2x32xf32>
    %cst_10 = arith.constant 0.000000e+00 : f32
    %13 = vector.broadcast %cst_10 : f32 to vector<2x32xf32>
    %14 = arith.maximumf %12, %13 : vector<2x32xf32>
    %c0_11 = arith.constant 0 : index
    %c0_12 = arith.constant 0 : index
    %15 = vector.load %arg3[%c0_11, %c0_12] : memref<32x5xf32, #tpu.memory_space<vmem>>, vector<32x5xf32>
    %cst_13 = arith.constant dense<0.000000e+00> : vector<2x5xf32>
    %16 = tpu.matmul %14, %15, %cst_13 {dimension_numbers = #tpu.dot_dimension_numbers<[1], [0], [0], [1], [0, 0, 1, 1], [], []>} : vector<2x32xf32>, vector<32x5xf32>, vector<2x5xf32> -> vector<2x5xf32>
    %c2 = arith.constant 2 : index
    %c0_14 = arith.constant 0 : index
    %17 = vector.load %arg4[%c2, %c0_14] : memref<3x160xf32, #tpu.memory_space<vmem>>, vector<1x5xf32>
    %18 = vector.broadcast %17 : vector<1x5xf32> to vector<2x5xf32>
    %19 = arith.addf %16, %18 : vector<2x5xf32>
    %cst_15 = arith.constant dense<0xFF800000> : vector<2xf32>
    %20 = vector.multi_reduction <maximumf>, %19, %cst_15 [1] : vector<2x5xf32> to vector<2xf32>
    %21 = vector.shape_cast %20 : vector<2xf32> to vector<2x1xf32>
    %22 = vector.broadcast %21 : vector<2x1xf32> to vector<2x5xf32>
    %23 = arith.subf %19, %22 : vector<2x5xf32>
    %24 = math.exp %23 : vector<2x5xf32>
    %cst_16 = arith.constant dense<0.000000e+00> : vector<2xf32>
    %25 = vector.multi_reduction <add>, %24, %cst_16 [1] : vector<2x5xf32> to vector<2xf32>
    %26 = vector.shape_cast %25 : vector<2xf32> to vector<2x1xf32>
    %27 = math.log %26 : vector<2x1xf32>
    %28 = vector.broadcast %27 : vector<2x1xf32> to vector<2x5xf32>
    %29 = arith.subf %23, %28 : vector<2x5xf32>
    %c0_17 = arith.constant 0 : index
    %c0_18 = arith.constant 0 : index
    %30 = vector.load %arg5[%c0_17, %c0_18] : memref<2x5xf32, #tpu.memory_space<vmem>>, vector<2x5xf32>
    tpu.vector_store %arg5[%c0_17, %c0_18], %29 {strides = array<i32>} : memref<2x5xf32, #tpu.memory_space<vmem>>, vector<2x5xf32>,
    return
  }
}

</mosaic_0001>

<llo_original>
// kernel: sortpool_forward.2
$region0: #{sortpool_forward.2}
  #allocation0 [shape = 'u32[]', space=smem, size = 0x4, offset = 0x4, fixed_abs, tag = 'smem constant byte address 0x4 - core index']
  #allocation1 [shape = 'u32[144,128]{1,0:T(1,128)}', space=vmem, size = 0x12000, scoped, tag = 'internal scratch']
  %s0 = inlined_call_operand.vmem [shape: f32[12,12], index: 0, kind: input, shape index: {}]
  %s1 = inlined_call_operand.vmem [shape: f32[12,32], index: 1, kind: input, shape index: {}]
  %s2 = inlined_call_operand.vmem [shape: f32[3,32,32], index: 2, kind: input, shape index: {}]
  %s3 = inlined_call_operand.hbm [shape: f32[3,32,32], index: 3, kind: input, shape index: {}]
  %s4 = inlined_call_operand.vmem [shape: f32[3,1,32], index: 4, kind: input, shape index: {}]
  %s5 = inlined_call_operand.vmem [shape: f32[12,32], index: 5, kind: output, shape index: {}]
  %s6 = sld [smem:[#allocation0]]
  $region34: #{sortpool_forward.2} parent=0
    _
  %s8 = ssub.s32 1, %s6
  %s9 = scalar_select 0, %s8, %s6
  $region1: #{sortpool_forward.2} parent=0
    #allocation2 [shape = 'u8[49152]{0}', space=vmem, size = 0xc000, scoped, tag = 'input window, operand 3, single buffered']
    #allocation3 [shape = 's32[1]{0}', space=sflag, size = 0x4, scoped, tag = 'scoped memory for sortpool_forward.2']
    %10 = vsyncpa [#allocation3], 0
    // Predicated region
    $region2: #{sortpool_forward.2} parent=1 // pred_check
      _
    $region3: #{sortpool_forward.2} parent=1 // pred_check_branch
      %12 = sbr.rel (0) target = $region5
    $region4: #{sortpool_forward.2} parent=1 // pred_region
      _
    $region5: #{sortpool_forward.2} parent=1 // pred_fallthru
      _
    // Predicated region
    $region6: #{sortpool_forward.2} parent=1 // pred_check
      _
    $region7: #{sortpool_forward.2} parent=1 // pred_check_branch
      %14 = sbr.rel (0) target = $region9
    $region8: #{sortpool_forward.2} parent=1 // pred_region
      _
    $region9: #{sortpool_forward.2} parent=1 // pred_fallthru
      _
    // Predicated region
    $region10: #{sortpool_forward.2} parent=1 // pred_check
      _
    $region11: #{sortpool_forward.2} parent=1 // pred_check_branch
      %16 = sbr.rel (0) target = $region13
    $region12: #{sortpool_forward.2} parent=1 // pred_region
      _
    $region13: #{sortpool_forward.2} parent=1 // pred_fallthru
      _
    // Predicated region
    $region14: #{sortpool_forward.2} parent=1 // pred_check
      _
    $region15: #{sortpool_forward.2} parent=1 // pred_check_branch
      %18 = sbr.rel (0) target = $region17
    $region16: #{sortpool_forward.2} parent=1 // pred_region
      %s20 = ssub.s32 1536, 1536
      %21 = vsyncadd [#allocation3], %s20
      %s22 = sshll.u32 [#allocation2], 4
      %s23 = int_to_ptr.vmem [resolvable:$true] %s22
      %28 = dma.hbm_to_vmem [thread:$0]  %s3, 1536, %s23, [#allocation3], 128, 128, 8
    $region17: #{sortpool_forward.2} parent=1 // pred_fallthru
      _
    // Predicated region
    $region18: #{sortpool_forward.2} parent=1 // pred_check
      _
    $region19: #{sortpool_forward.2} parent=1 // pred_check_branch
      %30 = sbr.rel (0) target = $region21
    $region20: #{sortpool_forward.2} parent=1 // pred_region
      _
    $region21: #{sortpool_forward.2} parent=1 // pred_fallthru
      _
    // Predicated region
    $region22: #{sortpool_forward.2} parent=1 // pred_check
      _
    $region23: #{sortpool_forward.2} parent=1 // pred_check_branch
      %32 = sbr.rel (0) target = $region25
    $region24: #{sortpool_forward.2} parent=1 // pred_region
      %33 = dma.done [#allocation3], 1536
    $region25: #{sortpool_forward.2} parent=1 // pred_fallthru
      _
    %v34 = vld [vmem:[%s0] sm:$0xff]
    %v35 = vld [vmem:[%s0 + $0x8] sm:$0xf]
    %v36 = vld [vmem:[%s1] sm:$0xff]
    %v37 = vld [vmem:[%s1 + $0x8] sm:$0xf]
    %vm38 = vcmask 97280
    %v40 = vsel %vm38, %v34, 0
    %v43 = vsel %vm38, %v35, 0
    %vm45 = vcmask 1043456
    %v47 = vsel %vm45, %v37, 0
    %49 = vmatprep.subr.mxu0 0.0
    %50 = vmatpush1.msra.mxu0 %v36
    %51 = vmatprep.subr.mxu0 0.0
    %52 = vmatpush1.msra.mxu0 %v47
    %53 = vmatprep.subr.mxu0 0.0
    %54 = vmatpush1.msra.mxu0 0.0
    %55 = vmatprep.subr.mxu0 0.0
    %56 = vmatpush1.msra.mxu0 0.0
    %57 = vmatprep.subr.mxu0 0.0
    %58 = vmatpush1.msra.mxu0 0.0
    %59 = vmatprep.subr.mxu0 0.0
    %60 = vmatpush1.msra.mxu0 0.0
    %61 = vmatprep.subr.mxu0 0.0
    %62 = vmatpush1.msra.mxu0 0.0
    %63 = vmatprep.subr.mxu0 0.0
    %64 = vmatpush1.msra.mxu0 0.0
    %65 = vmatprep.subr.mxu0 0.0
    %66 = vmatpush1.msra.mxu0 0.0
    %67 = vmatprep.subr.mxu0 0.0
    %68 = vmatpush1.msra.mxu0 0.0
    %69 = vmatprep.subr.mxu0 0.0
    %70 = vmatpush1.msra.mxu0 0.0
    %71 = vmatprep.subr.mxu0 0.0
    %72 = vmatpush1.msra.mxu0 0.0
    %73 = vmatprep.subr.mxu0 0.0
    %74 = vmatpush1.msra.mxu0 0.0
    %75 = vmatprep.subr.mxu0 0.0
    %76 = vmatpush1.msra.mxu0 0.0
    %77 = vmatprep.subr.mxu0 0.0
    %78 = vmatpush1.msra.mxu0 0.0
    %79 = vmatprep.subr.mxu0 0.0
    %80 = vmatpush1.msra.mxu0 0.0
    %81 = vmatprep.subr.mxu0 0.0
    %82 = vmatpush1.msra.mxu0 0.0
    %83 = vmatprep.subr.mxu0 0.0
    %84 = vmatpush1.msra.mxu0 0.0
    %85 = vmatprep.subr.mxu0 0.0
    %86 = vmatpush1.msra.mxu0 0.0
    %87 = vmatprep.subr.mxu0 0.0
    %88 = vmatpush1.msra.mxu0 0.0
    %89 = vmatprep.subr.mxu0 0.0
    %90 = vmatpush1.msra.mxu0 0.0
    %91 = vmatprep.subr.mxu0 0.0
    %92 = vmatpush1.msra.mxu0 0.0
    %93 = vmatprep.subr.mxu0 0.0
    %94 = vmatpush1.msra.mxu0 0.0
    %95 = vmatprep.subr.mxu0 0.0
    %96 = vmatpush1.msra.mxu0 0.0
    %97 = vmatprep.subr.mxu0 0.0
    %98 = vmatpush1.msra.mxu0 0.0
    %99 = vmatprep.subr.mxu0 0.0
    %100 = vmatpush1.msra.mxu0 0.0
    %101 = vmatprep.subr.mxu0 0.0
    %102 = vmatpush1.msra.mxu0 0.0
    %103 = vmatprep.subr.mxu0 0.0
    %104 = vmatpush1.msra.mxu0 0.0
    %105 = vmatprep.subr.mxu0 0.0
    %106 = vmatpush1.msra.mxu0 0.0
    %107 = vmatprep.subr.mxu0 0.0
    %108 = vmatpush1.msra.mxu0 0.0
    %109 = vmatprep.subr.mxu0 0.0
    %110 = vmatpush1.msra.mxu0 0.0
    %111 = vmatprep.subr.mxu0 0.0
    %112 = vmatpush1.msra.mxu0 0.0
    %113 = vmatprep.mubr.f32.mxu0 0.0
    %114 = vmatmul.mubr.f32.gmra.mrb[0].mxu0 %v40
    %v115 = vpop.f32.mrb[0].mxu0
    %v116 = vadd.f32 0.0, %v115
    %v117 = vpop.f32.mrb[0].mxu0
    %118 = vmatprep.mubr.f32.mxu0 0.0
    %119 = vmatmul.mubr.f32.gmra.mrb[0].mxu0 %v43
    %v120 = vpop.f32.mrb[0].mxu0
    %v121 = vadd.f32 0.0, %v120
    %v122 = vpop.f32.mrb[0].mxu0
    %123 = vdwg.mxu0
    %v124 = vld [vmem:[%s2] sm:$0xff]
    %v125 = vld [vmem:[%s2 + $0x8] sm:$0xff]
    %v126 = vld [vmem:[%s2 + $0x10] sm:$0xff]
    %v127 = vld [vmem:[%s2 + $0x18] sm:$0xff]
    %v128 = vld [vmem:[#allocation2] sm:$0xff]
    %v129 = vld [vmem:[#allocation2 + $0x8] sm:$0xff]
    %v130 = vld [vmem:[#allocation2 + $0x10] sm:$0xff]
    %v131 = vld [vmem:[#allocation2 + $0x18] sm:$0xff]
    %vm132 = vcmask 261120
    %v134 = vsel %vm132, %v36, 0
    %v136 = vsel %vm132, %v37, 0
    %138 = vmatprep.subr.mxu0 0.0
    %139 = vmatpush1.msra.mxu0 %v128
    %140 = vmatprep.subr.mxu0 0.0
    %141 = vmatpush1.msra.mxu0 %v129
    %142 = vmatprep.subr.mxu0 0.0
    %143 = vmatpush1.msra.mxu0 %v130
    %144 = vmatprep.subr.mxu0 0.0
    %145 = vmatpush1.msra.mxu0 %v131
    %146 = vmatprep.subr.mxu0 0.0
    %147 = vmatpush1.msra.mxu0 0.0
    %148 = vmatprep.subr.mxu0 0.0
    %149 = vmatpush1.msra.mxu0 0.0
    %150 = vmatprep.subr.mxu0 0.0
    %151 = vmatpush1.msra.mxu0 0.0
    %152 = vmatprep.subr.mxu0 0.0
    %153 = vmatpush1.msra.mxu0 0.0
    %154 = vmatprep.subr.mxu0 0.0
    %155 = vmatpush1.msra.mxu0 0.0
    %156 = vmatprep.subr.mxu0 0.0
    %157 = vmatpush1.msra.mxu0 0.0
    %158 = vmatprep.subr.mxu0 0.0
    %159 = vmatpush1.msra.mxu0 0.0
    %160 = vmatprep.subr.mxu0 0.0
    %161 = vmatpush1.msra.mxu0 0.0
    %162 = vmatprep.subr.mxu0 0.0
    %163 = vmatpush1.msra.mxu0 0.0
    %164 = vmatprep.subr.mxu0 0.0
    %165 = vmatpush1.msra.mxu0 0.0
    %166 = vmatprep.subr.mxu0 0.0
    %167 = vmatpush1.msra.mxu0 0.0
    %168 = vmatprep.subr.mxu0 0.0
    %169 = vmatpush1.msra.mxu0 0.0
    %170 = vmatprep.subr.mxu0 0.0
    %171 = vmatpush1.msra.mxu0 0.0
    %172 = vmatprep.subr.mxu0 0.0
    %173 = vmatpush1.msra.mxu0 0.0
    %174 = vmatprep.subr.mxu0 0.0
    %175 = vmatpush1.msra.mxu0 0.0
    %176 = vmatprep.subr.mxu0 0.0
    %177 = vmatpush1.msra.mxu0 0.0
    %178 = vmatprep.subr.mxu0 0.0
    %179 = vmatpush1.msra.mxu0 0.0
    %180 = vmatprep.subr.mxu0 0.0
    %181 = vmatpush1.msra.mxu0 0.0
    %182 = vmatprep.subr.mxu0 0.0
    %183 = vmatpush1.msra.mxu0 0.0
    %184 = vmatprep.subr.mxu0 0.0
    %185 = vmatpush1.msra.mxu0 0.0
    %186 = vmatprep.subr.mxu0 0.0
    %187 = vmatpush1.msra.mxu0 0.0
    %188 = vmatprep.subr.mxu0 0.0
    %189 = vmatpush1.msra.mxu0 0.0
    %190 = vmatprep.subr.mxu0 0.0
    %191 = vmatpush1.msra.mxu0 0.0
    %192 = vmatprep.subr.mxu0 0.0
    %193 = vmatpush1.msra.mxu0 0.0
    %194 = vmatprep.subr.mxu0 0.0
    %195 = vmatpush1.msra.mxu0 0.0
    %196 = vmatprep.subr.mxu0 0.0
    %197 = vmatpush1.msra.mxu0 0.0
    %198 = vmatprep.subr.mxu0 0.0
    %199 = vmatpush1.msra.mxu0 0.0
    %200 = vmatprep.subr.mxu0 0.0
    %201 = vmatpush1.msra.mxu0 0.0
    %202 = vmatprep.mubr.f32.mxu0 0.0
    %203 = vmatmul.mubr.f32.gmra.mrb[0].mxu0 %v134
    %v204 = vpop.f32.mrb[0].mxu0
    %v205 = vadd.f32 0.0, %v204
    %v206 = vpop.f32.mrb[0].mxu0
    %207 = vmatprep.mubr.f32.mxu0 0.0
    %208 = vmatmul.mubr.f32.gmra.mrb[0].mxu0 %v136
    %v209 = vpop.f32.mrb[0].mxu0
    %v210 = vadd.f32 0.0, %v209
    %v211 = vpop.f32.mrb[0].mxu0
    %212 = vdwg.mxu0
    %v214 = vsel %vm132, %v116, 0
    %v217 = vsel %vm132, %v121, 0
    %219 = vmatprep.subr.mxu0 0.0
    %220 = vmatpush1.msra.mxu0 %v124
    %221 = vmatprep.subr.mxu0 0.0
    %222 = vmatpush1.msra.mxu0 %v125
    %223 = vmatprep.subr.mxu0 0.0
    %224 = vmatpush1.msra.mxu0 %v126
    %225 = vmatprep.subr.mxu0 0.0
    %226 = vmatpush1.msra.mxu0 %v127
    %227 = vmatprep.subr.mxu0 0.0
    %228 = vmatpush1.msra.mxu0 0.0
    %229 = vmatprep.subr.mxu0 0.0
    %230 = vmatpush1.msra.mxu0 0.0
    %231 = vmatprep.subr.mxu0 0.0
    %232 = vmatpush1.msra.mxu0 0.0
    %233 = vmatprep.subr.mxu0 0.0
    %234 = vmatpush1.msra.mxu0 0.0
    %235 = vmatprep.subr.mxu0 0.0
    %236 = vmatpush1.msra.mxu0 0.0
    %237 = vmatprep.subr.mxu0 0.0
    %238 = vmatpush1.msra.mxu0 0.0
    %239 = vmatprep.subr.mxu0 0.0
    %240 = vmatpush1.msra.mxu0 0.0
    %241 = vmatprep.subr.mxu0 0.0
    %242 = vmatpush1.msra.mxu0 0.0
    %243 = vmatprep.subr.mxu0 0.0
    %244 = vmatpush1.msra.mxu0 0.0
    %245 = vmatprep.subr.mxu0 0.0
    %246 = vmatpush1.msra.mxu0 0.0
    %247 = vmatprep.subr.mxu0 0.0
    %248 = vmatpush1.msra.mxu0 0.0
    %249 = vmatprep.subr.mxu0 0.0
    %250 = vmatpush1.msra.mxu0 0.0
    %251 = vmatprep.subr.mxu0 0.0
    %252 = vmatpush1.msra.mxu0 0.0
    %253 = vmatprep.subr.mxu0 0.0
    %254 = vmatpush1.msra.mxu0 0.0
    %255 = vmatprep.subr.mxu0 0.0
    %256 = vmatpush1.msra.mxu0 0.0
    %257 = vmatprep.subr.mxu0 0.0
    %258 = vmatpush1.msra.mxu0 0.0
    %259 = vmatprep.subr.mxu0 0.0
    %260 = vmatpush1.msra.mxu0 0.0
    %261 = vmatprep.subr.mxu0 0.0
    %262 = vmatpush1.msra.mxu0 0.0
    %263 = vmatprep.subr.mxu0 0.0
    %264 = vmatpush1.msra.mxu0 0.0
    %265 = vmatprep.subr.mxu0 0.0
    %266 = vmatpush1.msra.mxu0 0.0
    %267 = vmatprep.subr.mxu0 0.0
    %268 = vmatpush1.msra.mxu0 0.0
    %269 = vmatprep.subr.mxu0 0.0
    %270 = vmatpush1.msra.mxu0 0.0
    %271 = vmatprep.subr.mxu0 0.0
    %272 = vmatpush1.msra.mxu0 0.0
    %273 = vmatprep.subr.mxu0 0.0
    %274 = vmatpush1.msra.mxu0 0.0
    %275 = vmatprep.subr.mxu0 0.0
    %276 = vmatpush1.msra.mxu0 0.0
    %277 = vmatprep.subr.mxu0 0.0
    %278 = vmatpush1.msra.mxu0 0.0
    %279 = vmatprep.subr.mxu0 0.0
    %280 = vmatpush1.msra.mxu0 0.0
    %281 = vmatprep.subr.mxu0 0.0
    %282 = vmatpush1.msra.mxu0 0.0
    %283 = vmatprep.mubr.f32.mxu0 0.0
    %284 = vmatmul.mubr.f32.gmra.mrb[0].mxu0 %v214
    %v285 = vpop.f32.mrb[0].mxu0
    %v286 = vadd.f32 %v205, %v285
    %v287 = vpop.f32.mrb[0].mxu0
    %288 = vmatprep.mubr.f32.mxu0 0.0
    %289 = vmatmul.mubr.f32.gmra.mrb[0].mxu0 %v217
    %v290 = vpop.f32.mrb[0].mxu0
    %v291 = vadd.f32 %v210, %v290
    %v292 = vpop.f32.mrb[0].mxu0
    %293 = vdwg.mxu0
    %v294 = vld [vmem:[%s4] sm:$0x1]
    %v296 = vlaneseq
    %v297 = vshrl.u32 %v296, 7
    %v298 = vsub.s32 0, %v297
    %v299 = vrot.slane %v294, %v298
    %v301 = vadd.f32 %v286, %v299
    %v302 = vadd.f32 %v291, %v299
    %v303 = vmax.f32 %v301, 0.0
    %v304 = vmax.f32 %v302, 0.0
    %v306 = vsel %vm45, %v304, 0
    %308 = vmatprep.subr.mxu0 0.0
    %309 = vmatpush1.msra.mxu0 %v303
    %310 = vmatprep.subr.mxu0 0.0
    %311 = vmatpush1.msra.mxu0 %v306
    %312 = vmatprep.subr.mxu0 0.0
    %313 = vmatpush1.msra.mxu0 0.0
    %314 = vmatprep.subr.mxu0 0.0
    %315 = vmatpush1.msra.mxu0 0.0
    %316 = vmatprep.subr.mxu0 0.0
    %317 = vmatpush1.msra.mxu0 0.0
    %318 = vmatprep.subr.mxu0 0.0
    %319 = vmatpush1.msra.mxu0 0.0
    %320 = vmatprep.subr.mxu0 0.0
    %321 = vmatpush1.msra.mxu0 0.0
    %322 = vmatprep.subr.mxu0 0.0
    %323 = vmatpush1.msra.mxu0 0.0
    %324 = vmatprep.subr.mxu0 0.0
    %325 = vmatpush1.msra.mxu0 0.0
    %326 = vmatprep.subr.mxu0 0.0
    %327 = vmatpush1.msra.mxu0 0.0
    %328 = vmatprep.subr.mxu0 0.0
    %329 = vmatpush1.msra.mxu0 0.0
    %330 = vmatprep.subr.mxu0 0.0
    %331 = vmatpush1.msra.mxu0 0.0
    %332 = vmatprep.subr.mxu0 0.0
    %333 = vmatpush1.msra.mxu0 0.0
    %334 = vmatprep.subr.mxu0 0.0
    %335 = vmatpush1.msra.mxu0 0.0
    %336 = vmatprep.subr.mxu0 0.0
    %337 = vmatpush1.msra.mxu0 0.0
    %338 = vmatprep.subr.mxu0 0.0
    %339 = vmatpush1.msra.mxu0 0.0
    %340 = vmatprep.subr.mxu0 0.0
    %341 = vmatpush1.msra.mxu0 0.0
    %342 = vmatprep.subr.mxu0 0.0
    %343 = vmatpush1.msra.mxu0 0.0
    %344 = vmatprep.subr.mxu0 0.0
    %345 = vmatpush1.msra.mxu0 0.0
    %346 = vmatprep.subr.mxu0 0.0
    %347 = vmatpush1.msra.mxu0 0.0
    %348 = vmatprep.subr.mxu0 0.0
    %349 = vmatpush1.msra.mxu0 0.0
    %350 = vmatprep.subr.mxu0 0.0
    %351 = vmatpush1.msra.mxu0 0.0
    %352 = vmatprep.subr.mxu0 0.0
    %353 = vmatpush1.msra.mxu0 0.0
    %354 = vmatprep.subr.mxu0 0.0
    %355 = vmatpush1.msra.mxu0 0.0
    %356 = vmatprep.subr.mxu0 0.0
    %357 = vmatpush1.msra.mxu0 0.0
    %358 = vmatprep.subr.mxu0 0.0
    %359 = vmatpush1.msra.mxu0 0.0
    %360 = vmatprep.subr.mxu0 0.0
    %361 = vmatpush1.msra.mxu0 0.0
    %362 = vmatprep.subr.mxu0 0.0
    %363 = vmatpush1.msra.mxu0 0.0
    %364 = vmatprep.subr.mxu0 0.0
    %365 = vmatpush1.msra.mxu0 0.0
    %366 = vmatprep.subr.mxu0 0.0
    %367 = vmatpush1.msra.mxu0 0.0
    %368 = vmatprep.subr.mxu0 0.0
    %369 = vmatpush1.msra.mxu0 0.0
    %370 = vmatprep.subr.mxu0 0.0
    %371 = vmatpush1.msra.mxu0 0.0
    %372 = vmatprep.mubr.f32.mxu0 0.0
    %373 = vmatmul.mubr.f32.gmra.mrb[0].mxu0 %v40
    %v374 = vpop.f32.mrb[0].mxu0
    %v375 = vadd.f32 0.0, %v374
    %v376 = vpop.f32.mrb[0].mxu0
    %377 = vmatprep.mubr.f32.mxu0 0.0
    %378 = vmatmul.mubr.f32.gmra.mrb[0].mxu0 %v43
    %v379 = vpop.f32.mrb[0].mxu0
    %v380 = vadd.f32 0.0, %v379
    %v381 = vpop.f32.mrb[0].mxu0
    %382 = vdwg.mxu0
    %s383 = scalar_lea.vmem %s2, 32
    %v384 = vld [vmem:[%s383] sm:$0xff]
    %v385 = vld [vmem:[%s383 + $0x8] sm:$0xff]
    %v386 = vld [vmem:[%s383 + $0x10] sm:$0xff]
    %v387 = vld [vmem:[%s383 + $0x18] sm:$0xff]
    %s388 = scalar_lea.vmem [#allocation2], 32
    %v389 = vld [vmem:[%s388] sm:$0xff]
    %v390 = vld [vmem:[%s388 + $0x8] sm:$0xff]
    %v391 = vld [vmem:[%s388 + $0x10] sm:$0xff]
    %v392 = vld [vmem:[%s388 + $0x18] sm:$0xff]
    %v394 = vsel %vm132, %v303, 0
    %v396 = vsel %vm132, %v304, 0
    %398 = vmatprep.subr.mxu0 0.0
    %399 = vmatpush1.msra.mxu0 %v389
    %400 = vmatprep.subr.mxu0 0.0
    %401 = vmatpush1.msra.mxu0 %v390
    %402 = vmatprep.subr.mxu0 0.0
    %403 = vmatpush1.msra.mxu0 %v391
    %404 = vmatprep.subr.mxu0 0.0
    %405 = vmatpush1.msra.mxu0 %v392
    %406 = vmatprep.subr.mxu0 0.0
    %407 = vmatpush1.msra.mxu0 0.0
    %408 = vmatprep.subr.mxu0 0.0
    %409 = vmatpush1.msra.mxu0 0.0
    %410 = vmatprep.subr.mxu0 0.0
    %411 = vmatpush1.msra.mxu0 0.0
    %412 = vmatprep.subr.mxu0 0.0
    %413 = vmatpush1.msra.mxu0 0.0
    %414 = vmatprep.subr.mxu0 0.0
    %415 = vmatpush1.msra.mxu0 0.0
    %416 = vmatprep.subr.mxu0 0.0
    %417 = vmatpush1.msra.mxu0 0.0
    %418 = vmatprep.subr.mxu0 0.0
    %419 = vmatpush1.msra.mxu0 0.0
    %420 = vmatprep.subr.mxu0 0.0
    %421 = vmatpush1.msra.mxu0 0.0
    %422 = vmatprep.subr.mxu0 0.0
    %423 = vmatpush1.msra.mxu0 0.0
    %424 = vmatprep.subr.mxu0 0.0
    %425 = vmatpush1.msra.mxu0 0.0
    %426 = vmatprep.subr.mxu0 0.0
    %427 = vmatpush1.msra.mxu0 0.0
    %428 = vmatprep.subr.mxu0 0.0
    %429 = vmatpush1.msra.mxu0 0.0
    %430 = vmatprep.subr.mxu0 0.0
    %431 = vmatpush1.msra.mxu0 0.0
    %432 = vmatprep.subr.mxu0 0.0
    %433 = vmatpush1.msra.mxu0 0.0
    %434 = vmatprep.subr.mxu0 0.0
    %435 = vmatpush1.msra.mxu0 0.0
    %436 = vmatprep.subr.mxu0 0.0
    %437 = vmatpush1.msra.mxu0 0.0
    %438 = vmatprep.subr.mxu0 0.0
    %439 = vmatpush1.msra.mxu0 0.0
    %440 = vmatprep.subr.mxu0 0.0
    %441 = vmatpush1.msra.mxu0 0.0
    %442 = vmatprep.subr.mxu0 0.0
    %443 = vmatpush1.msra.mxu0 0.0
    %444 = vmatprep.subr.mxu0 0.0
    %445 = vmatpush1.msra.mxu0 0.0
    %446 = vmatprep.subr.mxu0 0.0
    %447 = vmatpush1.msra.mxu0 0.0
    %448 = vmatprep.subr.mxu0 0.0
    %449 = vmatpush1.msra.mxu0 0.0
    %450 = vmatprep.subr.mxu0 0.0
    %451 = vmatpush1.msra.mxu0 0.0
    %452 = vmatprep.subr.mxu0 0.0
    %453 = vmatpush1.msra.mxu0 0.0
    %454 = vmatprep.subr.mxu0 0.0
    %455 = vmatpush1.msra.mxu0 0.0
    %456 = vmatprep.subr.mxu0 0.0
    %457 = vmatpush1.msra.mxu0 0.0
    %458 = vmatprep.subr.mxu0 0.0
    %459 = vmatpush1.msra.mxu0 0.0
    %460 = vmatprep.subr.mxu0 0.0
    %461 = vmatpush1.msra.mxu0 0.0
    %462 = vmatprep.mubr.f32.mxu0 0.0
    %463 = vmatmul.mubr.f32.gmra.mrb[0].mxu0 %v394
    %v464 = vpop.f32.mrb[0].mxu0
    %v465 = vadd.f32 0.0, %v464
    %v466 = vpop.f32.mrb[0].mxu0
    %467 = vmatprep.mubr.f32.mxu0 0.0
    %468 = vmatmul.mubr.f32.gmra.mrb[0].mxu0 %v396
    %v469 = vpop.f32.mrb[0].mxu0
    %v470 = vadd.f32 0.0, %v469
    %v471 = vpop.f32.mrb[0].mxu0
    %472 = vdwg.mxu0
    %v474 = vsel %vm132, %v375, 0
    %v477 = vsel %vm132, %v380, 0
    %479 = vmatprep.subr.mxu0 0.0
    %480 = vmatpush1.msra.mxu0 %v384
    %481 = vmatprep.subr.mxu0 0.0
    %482 = vmatpush1.msra.mxu0 %v385
    %483 = vmatprep.subr.mxu0 0.0
    %484 = vmatpush1.msra.mxu0 %v386
    %485 = vmatprep.subr.mxu0 0.0
    %486 = vmatpush1.msra.mxu0 %v387
    %487 = vmatprep.subr.mxu0 0.0
    %488 = vmatpush1.msra.mxu0 0.0
    %489 = vmatprep.subr.mxu0 0.0
    %490 = vmatpush1.msra.mxu0 0.0
    %491 = vmatprep.subr.mxu0 0.0
    %492 = vmatpush1.msra.mxu0 0.0
    %493 = vmatprep.subr.mxu0 0.0
    %494 = vmatpush1.msra.mxu0 0.0
    %495 = vmatprep.subr.mxu0 0.0
    %496 = vmatpush1.msra.mxu0 0.0
    %497 = vmatprep.subr.mxu0 0.0
    %498 = vmatpush1.msra.mxu0 0.0
    %499 = vmatprep.subr.mxu0 0.0
    %500 = vmatpush1.msra.mxu0 0.0
    %501 = vmatprep.subr.mxu0 0.0
    %502 = vmatpush1.msra.mxu0 0.0
    %503 = vmatprep.subr.mxu0 0.0
    %504 = vmatpush1.msra.mxu0 0.0
    %505 = vmatprep.subr.mxu0 0.0
    %506 = vmatpush1.msra.mxu0 0.0
    %507 = vmatprep.subr.mxu0 0.0
    %508 = vmatpush1.msra.mxu0 0.0
    %509 = vmatprep.subr.mxu0 0.0
    %510 = vmatpush1.msra.mxu0 0.0
    %511 = vmatprep.subr.mxu0 0.0
    %512 = vmatpush1.msra.mxu0 0.0
    %513 = vmatprep.subr.mxu0 0.0
    %514 = vmatpush1.msra.mxu0 0.0
    %515 = vmatprep.subr.mxu0 0.0
    %516 = vmatpush1.msra.mxu0 0.0
    %517 = vmatprep.subr.mxu0 0.0
    %518 = vmatpush1.msra.mxu0 0.0
    %519 = vmatprep.subr.mxu0 0.0
    %520 = vmatpush1.msra.mxu0 0.0
    %521 = vmatprep.subr.mxu0 0.0
    %522 = vmatpush1.msra.mxu0 0.0
    %523 = vmatprep.subr.mxu0 0.0
    %524 = vmatpush1.msra.mxu0 0.0
    %525 = vmatprep.subr.mxu0 0.0
    %526 = vmatpush1.msra.mxu0 0.0
    %527 = vmatprep.subr.mxu0 0.0
    %528 = vmatpush1.msra.mxu0 0.0
    %529 = vmatprep.subr.mxu0 0.0
    %530 = vmatpush1.msra.mxu0 0.0
    %531 = vmatprep.subr.mxu0 0.0
    %532 = vmatpush1.msra.mxu0 0.0
    %533 = vmatprep.subr.mxu0 0.0
    %534 = vmatpush1.msra.mxu0 0.0
    %535 = vmatprep.subr.mxu0 0.0
    %536 = vmatpush1.msra.mxu0 0.0
    %537 = vmatprep.subr.mxu0 0.0
    %538 = vmatpush1.msra.mxu0 0.0
    %539 = vmatprep.subr.mxu0 0.0
    %540 = vmatpush1.msra.mxu0 0.0
    %541 = vmatprep.subr.mxu0 0.0
    %542 = vmatpush1.msra.mxu0 0.0
    %543 = vmatprep.mubr.f32.mxu0 0.0
    %544 = vmatmul.mubr.f32.gmra.mrb[0].mxu0 %v474
    %v545 = vpop.f32.mrb[0].mxu0
    %v546 = vadd.f32 %v465, %v545
    %v547 = vpop.f32.mrb[0].mxu0
    %548 = vmatprep.mubr.f32.mxu0 0.0
    %549 = vmatmul.mubr.f32.gmra.mrb[0].mxu0 %v477
    %v550 = vpop.f32.mrb[0].mxu0
    %v551 = vadd.f32 %v470, %v550
    %v552 = vpop.f32.mrb[0].mxu0
    %553 = vdwg.mxu0
    %s554 = scalar_lea.vmem %s4, 1
    %v555 = vld [vmem:[%s554] sm:$0x1]
    %v557 = vlaneseq
    %v558 = vshrl.u32 %v557, 7
    %v559 = vsub.s32 0, %v558
    %v560 = vrot.slane %v555, %v559
    %v562 = vadd.f32 %v546, %v560
    %v563 = vadd.f32 %v551, %v560
    %v564 = vmax.f32 %v562, 0.0
    %v565 = vmax.f32 %v563, 0.0
    %v567 = vsel %vm45, %v565, 0
    %569 = vmatprep.subr.mxu0 0.0
    %570 = vmatpush1.msra.mxu0 %v564
    %571 = vmatprep.subr.mxu0 0.0
    %572 = vmatpush1.msra.mxu0 %v567
    %573 = vmatprep.subr.mxu0 0.0
    %574 = vmatpush1.msra.mxu0 0.0
    %575 = vmatprep.subr.mxu0 0.0
    %576 = vmatpush1.msra.mxu0 0.0
    %577 = vmatprep.subr.mxu0 0.0
    %578 = vmatpush1.msra.mxu0 0.0
    %579 = vmatprep.subr.mxu0 0.0
    %580 = vmatpush1.msra.mxu0 0.0
    %581 = vmatprep.subr.mxu0 0.0
    %582 = vmatpush1.msra.mxu0 0.0
    %583 = vmatprep.subr.mxu0 0.0
    %584 = vmatpush1.msra.mxu0 0.0
    %585 = vmatprep.subr.mxu0 0.0
    %586 = vmatpush1.msra.mxu0 0.0
    %587 = vmatprep.subr.mxu0 0.0
    %588 = vmatpush1.msra.mxu0 0.0
    %589 = vmatprep.subr.mxu0 0.0
    %590 = vmatpush1.msra.mxu0 0.0
    %591 = vmatprep.subr.mxu0 0.0
    %592 = vmatpush1.msra.mxu0 0.0
    %593 = vmatprep.subr.mxu0 0.0
    %594 = vmatpush1.msra.mxu0 0.0
    %595 = vmatprep.subr.mxu0 0.0
    %596 = vmatpush1.msra.mxu0 0.0
    %597 = vmatprep.subr.mxu0 0.0
    %598 = vmatpush1.msra.mxu0 0.0
    %599 = vmatprep.subr.mxu0 0.0
    %600 = vmatpush1.msra.mxu0 0.0
    %601 = vmatprep.subr.mxu0 0.0
    %602 = vmatpush1.msra.mxu0 0.0
    %603 = vmatprep.subr.mxu0 0.0
    %604 = vmatpush1.msra.mxu0 0.0
    %605 = vmatprep.subr.mxu0 0.0
    %606 = vmatpush1.msra.mxu0 0.0
    %607 = vmatprep.subr.mxu0 0.0
    %608 = vmatpush1.msra.mxu0 0.0
    %609 = vmatprep.subr.mxu0 0.0
    %610 = vmatpush1.msra.mxu0 0.0
    %611 = vmatprep.subr.mxu0 0.0
    %612 = vmatpush1.msra.mxu0 0.0
    %613 = vmatprep.subr.mxu0 0.0
    %614 = vmatpush1.msra.mxu0 0.0
    %615 = vmatprep.subr.mxu0 0.0
    %616 = vmatpush1.msra.mxu0 0.0
    %617 = vmatprep.subr.mxu0 0.0
    %618 = vmatpush1.msra.mxu0 0.0
    %619 = vmatprep.subr.mxu0 0.0
    %620 = vmatpush1.msra.mxu0 0.0
    %621 = vmatprep.subr.mxu0 0.0
    %622 = vmatpush1.msra.mxu0 0.0
    %623 = vmatprep.subr.mxu0 0.0
    %624 = vmatpush1.msra.mxu0 0.0
    %625 = vmatprep.subr.mxu0 0.0
    %626 = vmatpush1.msra.mxu0 0.0
    %627 = vmatprep.subr.mxu0 0.0
    %628 = vmatpush1.msra.mxu0 0.0
    %629 = vmatprep.subr.mxu0 0.0
    %630 = vmatpush1.msra.mxu0 0.0
    %631 = vmatprep.subr.mxu0 0.0
    %632 = vmatpush1.msra.mxu0 0.0
    %633 = vmatprep.mubr.f32.mxu0 0.0
    %634 = vmatmul.mubr.f32.gmra.mrb[0].mxu0 %v40
    %v635 = vpop.f32.mrb[0].mxu0
    %v636 = vadd.f32 0.0, %v635
    %v637 = vpop.f32.mrb[0].mxu0
    %638 = vmatprep.mubr.f32.mxu0 0.0
    %639 = vmatmul.mubr.f32.gmra.mrb[0].mxu0 %v43
    %v640 = vpop.f32.mrb[0].mxu0
    %v641 = vadd.f32 0.0, %v640
    %v642 = vpop.f32.mrb[0].mxu0
    %643 = vdwg.mxu0
    %s644 = scalar_lea.vmem %s2, 64
    %v645 = vld [vmem:[%s644] sm:$0xff]
    %v646 = vld [vmem:[%s644 + $0x8] sm:$0xff]
    %v647 = vld [vmem:[%s644 + $0x10] sm:$0xff]
    %v648 = vld [vmem:[%s644 + $0x18] sm:$0xff]
    %s649 = scalar_lea.vmem [#allocation2], 64
    %v650 = vld [vmem:[%s649] sm:$0xff]
    %v651 = vld [vmem:[%s649 + $0x8] sm:$0xff]
    %v652 = vld [vmem:[%s649 + $0x10] sm:$0xff]
    %v653 = vld [vmem:[%s649 + $0x18] sm:$0xff]
    %v655 = vsel %vm132, %v564, 0
    %v657 = vsel %vm132, %v565, 0
    %659 = vmatprep.subr.mxu0 0.0
    %660 = vmatpush1.msra.mxu0 %v650
    %661 = vmatprep.subr.mxu0 0.0
    %662 = vmatpush1.msra.mxu0 %v651
    %663 = vmatprep.subr.mxu0 0.0
    %664 = vmatpush1.msra.mxu0 %v652
    %665 = vmatprep.subr.mxu0 0.0
    %666 = vmatpush1.msra.mxu0 %v653
    %667 = vmatprep.subr.mxu0 0.0
    %668 = vmatpush1.msra.mxu0 0.0
    %669 = vmatprep.subr.mxu0 0.0
    %670 = vmatpush1.msra.mxu0 0.0
    %671 = vmatprep.subr.mxu0 0.0
    %672 = vmatpush1.msra.mxu0 0.0
    %673 = vmatprep.subr.mxu0 0.0
    %674 = vmatpush1.msra.mxu0 0.0
    %675 = vmatprep.subr.mxu0 0.0
    %676 = vmatpush1.msra.mxu0 0.0
    %677 = vmatprep.subr.mxu0 0.0
    %678 = vmatpush1.msra.mxu0 0.0
    %679 = vmatprep.subr.mxu0 0.0
    %680 = vmatpush1.msra.mxu0 0.0
    %681 = vmatprep.subr.mxu0 0.0
    %682 = vmatpush1.msra.mxu0 0.0
    %683 = vmatprep.subr.mxu0 0.0
    %684 = vmatpush1.msra.mxu0 0.0
    %685 = vmatprep.subr.mxu0 0.0
    %686 = vmatpush1.msra.mxu0 0.0
    %687 = vmatprep.subr.mxu0 0.0
    %688 = vmatpush1.msra.mxu0 0.0
    %689 = vmatprep.subr.mxu0 0.0
    %690 = vmatpush1.msra.mxu0 0.0
    %691 = vmatprep.subr.mxu0 0.0
    %692 = vmatpush1.msra.mxu0 0.0
    %693 = vmatprep.subr.mxu0 0.0
    %694 = vmatpush1.msra.mxu0 0.0
    %695 = vmatprep.subr.mxu0 0.0
    %696 = vmatpush1.msra.mxu0 0.0
    %697 = vmatprep.subr.mxu0 0.0
    %698 = vmatpush1.msra.mxu0 0.0
    %699 = vmatprep.subr.mxu0 0.0
    %700 = vmatpush1.msra.mxu0 0.0
    %701 = vmatprep.subr.mxu0 0.0
    %702 = vmatpush1.msra.mxu0 0.0
    %703 = vmatprep.subr.mxu0 0.0
    %704 = vmatpush1.msra.mxu0 0.0
    %705 = vmatprep.subr.mxu0 0.0
    %706 = vmatpush1.msra.mxu0 0.0
    %707 = vmatprep.subr.mxu0 0.0
    %708 = vmatpush1.msra.mxu0 0.0
    %709 = vmatprep.subr.mxu0 0.0
    %710 = vmatpush1.msra.mxu0 0.0
    %711 = vmatprep.subr.mxu0 0.0
    %712 = vmatpush1.msra.mxu0 0.0
    %713 = vmatprep.subr.mxu0 0.0
    %714 = vmatpush1.msra.mxu0 0.0
    %715 = vmatprep.subr.mxu0 0.0
    %716 = vmatpush1.msra.mxu0 0.0
    %717 = vmatprep.subr.mxu0 0.0
    %718 = vmatpush1.msra.mxu0 0.0
    %719 = vmatprep.subr.mxu0 0.0
    %720 = vmatpush1.msra.mxu0 0.0
    %721 = vmatprep.subr.mxu0 0.0
    %722 = vmatpush1.msra.mxu0 0.0
    %723 = vmatprep.mubr.f32.mxu0 0.0
    %724 = vmatmul.mubr.f32.gmra.mrb[0].mxu0 %v655
    %v725 = vpop.f32.mrb[0].mxu0
    %v726 = vadd.f32 0.0, %v725
    %v727 = vpop.f32.mrb[0].mxu0
    %728 = vmatprep.mubr.f32.mxu0 0.0
    %729 = vmatmul.mubr.f32.gmra.mrb[0].mxu0 %v657
    %v730 = vpop.f32.mrb[0].mxu0
    %v731 = vadd.f32 0.0, %v730
    %v732 = vpop.f32.mrb[0].mxu0
    %733 = vdwg.mxu0
    %v735 = vsel %vm132, %v636, 0
    %v738 = vsel %vm132, %v641, 0
    %740 = vmatprep.subr.mxu0 0.0
    %741 = vmatpush1.msra.mxu0 %v645
    %742 = vmatprep.subr.mxu0 0.0
    %743 = vmatpush1.msra.mxu0 %v646
    %744 = vmatprep.subr.mxu0 0.0
    %745 = vmatpush1.msra.mxu0 %v647
    %746 = vmatprep.subr.mxu0 0.0
    %747 = vmatpush1.msra.mxu0 %v648
    %748 = vmatprep.subr.mxu0 0.0
    %749 = vmatpush1.msra.mxu0 0.0
    %750 = vmatprep.subr.mxu0 0.0
    %751 = vmatpush1.msra.mxu0 0.0
    %752 = vmatprep.subr.mxu0 0.0
    %753 = vmatpush1.msra.mxu0 0.0
    %754 = vmatprep.subr.mxu0 0.0
    %755 = vmatpush1.msra.mxu0 0.0
    %756 = vmatprep.subr.mxu0 0.0
    %757 = vmatpush1.msra.mxu0 0.0
    %758 = vmatprep.subr.mxu0 0.0
    %759 = vmatpush1.msra.mxu0 0.0
    %760 = vmatprep.subr.mxu0 0.0
    %761 = vmatpush1.msra.mxu0 0.0
    %762 = vmatprep.subr.mxu0 0.0
    %763 = vmatpush1.msra.mxu0 0.0
    %764 = vmatprep.subr.mxu0 0.0
    %765 = vmatpush1.msra.mxu0 0.0
    %766 = vmatprep.subr.mxu0 0.0
    %767 = vmatpush1.msra.mxu0 0.0
    %768 = vmatprep.subr.mxu0 0.0
    %769 = vmatpush1.msra.mxu0 0.0
    %770 = vmatprep.subr.mxu0 0.0
    %771 = vmatpush1.msra.mxu0 0.0
    %772 = vmatprep.subr.mxu0 0.0
    %773 = vmatpush1.msra.mxu0 0.0
    %774 = vmatprep.subr.mxu0 0.0
    %775 = vmatpush1.msra.mxu0 0.0
    %776 = vmatprep.subr.mxu0 0.0
    %777 = vmatpush1.msra.mxu0 0.0
    %778 = vmatprep.subr.mxu0 0.0
    %779 = vmatpush1.msra.mxu0 0.0
    %780 = vmatprep.subr.mxu0 0.0
    %781 = vmatpush1.msra.mxu0 0.0
    %782 = vmatprep.subr.mxu0 0.0
    %783 = vmatpush1.msra.mxu0 0.0
    %784 = vmatprep.subr.mxu0 0.0
    %785 = vmatpush1.msra.mxu0 0.0
    %786 = vmatprep.subr.mxu0 0.0
    %787 = vmatpush1.msra.mxu0 0.0
    %788 = vmatprep.subr.mxu0 0.0
    %789 = vmatpush1.msra.mxu0 0.0
    %790 = vmatprep.subr.mxu0 0.0
    %791 = vmatpush1.msra.mxu0 0.0
    %792 = vmatprep.subr.mxu0 0.0
    %793 = vmatpush1.msra.mxu0 0.0
    %794 = vmatprep.subr.mxu0 0.0
    %795 = vmatpush1.msra.mxu0 0.0
    %796 = vmatprep.subr.mxu0 0.0
    %797 = vmatpush1.msra.mxu0 0.0
    %798 = vmatprep.subr.mxu0 0.0
    %799 = vmatpush1.msra.mxu0 0.0
    %800 = vmatprep.subr.mxu0 0.0
    %801 = vmatpush1.msra.mxu0 0.0
    %802 = vmatprep.subr.mxu0 0.0
    %803 = vmatpush1.msra.mxu0 0.0
    %804 = vmatprep.mubr.f32.mxu0 0.0
    %805 = vmatmul.mubr.f32.gmra.mrb[0].mxu0 %v735
    %v806 = vpop.f32.mrb[0].mxu0
    %v807 = vadd.f32 %v726, %v806
    %v808 = vpop.f32.mrb[0].mxu0
    %809 = vmatprep.mubr.f32.mxu0 0.0
    %810 = vmatmul.mubr.f32.gmra.mrb[0].mxu0 %v738
    %v811 = vpop.f32.mrb[0].mxu0
    %v812 = vadd.f32 %v731, %v811
    %v813 = vpop.f32.mrb[0].mxu0
    %814 = vdwg.mxu0
    %s815 = scalar_lea.vmem %s4, 2
    %v816 = vld [vmem:[%s815] sm:$0x1]
    %v818 = vlaneseq
    %v819 = vshrl.u32 %v818, 7
    %v820 = vsub.s32 0, %v819
    %v821 = vrot.slane %v816, %v820
    %v823 = vadd.f32 %v807, %v821
    %v824 = vadd.f32 %v812, %v821
    %v825 = vmax.f32 %v823, 0.0
    %v826 = vmax.f32 %v824, 0.0
    %827 = vst.msk [vmem:[%s5] sm:$0xff] %vm132, %v825
    %vm828 = vcmask 257024
    %829 = vst.msk [vmem:[%s5 + $0x8] sm:$0xf] %vm828, %v826
    // Predicated region
    $region26: #{sortpool_forward.2} parent=1 // pred_check
      _
    $region27: #{sortpool_forward.2} parent=1 // pred_check_branch
      %831 = sbr.rel (0) target = $region29
    $region28: #{sortpool_forward.2} parent=1 // pred_region
      _
    $region29: #{sortpool_forward.2} parent=1 // pred_fallthru
      _
    // Predicated region
    $region30: #{sortpool_forward.2} parent=1 // pred_check
      _
    $region31: #{sortpool_forward.2} parent=1 // pred_check_branch
      %833 = sbr.rel (0) target = $region33
    $region32: #{sortpool_forward.2} parent=1 // pred_region
      _
    $region33: #{sortpool_forward.2} parent=1 // pred_fallthru
      _
    %834 = vsyncpa [#allocation3], 1

// kernel: sortpool_forward.3
$region0: #{sortpool_forward.3}
  #allocation0 [shape = 'u32[]', space=smem, size = 0x4, offset = 0x4, fixed_abs, tag = 'smem constant byte address 0x4 - core index']
  #allocation1 [shape = 'u32[144,128]{1,0:T(1,128)}', space=vmem, size = 0x12000, scoped, tag = 'internal scratch']
  %s0 = inlined_call_operand.vmem [shape: f32[2,224], index: 0, kind: input, shape index: {}]
  %s1 = inlined_call_operand.vmem [shape: f32[224,160], index: 1, kind: input, shape index: {}]
  %s2 = inlined_call_operand.vmem [shape: f32[160,32], index: 2, kind: input, shape index: {}]
  %s3 = inlined_call_operand.vmem [shape: f32[32,5], index: 3, kind: input, shape index: {}]
  %s4 = inlined_call_operand.vmem [shape: f32[3,160], index: 4, kind: input, shape index: {}]
  %s5 = inlined_call_operand.hbm [shape: f32[2,5], index: 5, kind: output, shape index: {}]
  %s6 = sld [smem:[#allocation0]]
  $region30: #{sortpool_forward.3} parent=0
    _
  %s8 = ssub.s32 1, %s6
  %s9 = scalar_select 0, %s8, %s6
  $region1: #{sortpool_forward.3} parent=0
    #allocation2 [shape = 'u8[1024]{0}', space=vmem, size = 0x400, scoped, tag = 'output window, operand 0, single buffered']
    #allocation3 [shape = 's32[1]{0}', space=sflag, size = 0x4, scoped, tag = 'scoped memory for sortpool_forward.3']
    %10 = vsyncpa [#allocation3], 0
    // Predicated region
    $region2: #{sortpool_forward.3} parent=1 // pred_check
      _
    $region3: #{sortpool_forward.3} parent=1 // pred_check_branch
      %12 = sbr.rel (0) target = $region5
    $region4: #{sortpool_forward.3} parent=1 // pred_region
      _
    $region5: #{sortpool_forward.3} parent=1 // pred_fallthru
      _
    // Predicated region
    $region6: #{sortpool_forward.3} parent=1 // pred_check
      _
    $region7: #{sortpool_forward.3} parent=1 // pred_check_branch
      %14 = sbr.rel (0) target = $region9
    $region8: #{sortpool_forward.3} parent=1 // pred_region
      _
    $region9: #{sortpool_forward.3} parent=1 // pred_fallthru
      _
    // Predicated region
    $region10: #{sortpool_forward.3} parent=1 // pred_check
      _
    $region11: #{sortpool_forward.3} parent=1 // pred_check_branch
      %16 = sbr.rel (0) target = $region13
    $region12: #{sortpool_forward.3} parent=1 // pred_region
      _
    $region13: #{sortpool_forward.3} parent=1 // pred_fallthru
      _
    // Predicated region
    $region14: #{sortpool_forward.3} parent=1 // pred_check
      _
    $region15: #{sortpool_forward.3} parent=1 // pred_check_branch
      %18 = sbr.rel (0) target = $region17
    $region16: #{sortpool_forward.3} parent=1 // pred_region
      _
    $region17: #{sortpool_forward.3} parent=1 // pred_fallthru
      _
    // Predicated region
    $region18: #{sortpool_forward.3} parent=1 // pred_check
      _
    $region19: #{sortpool_forward.3} parent=1 // pred_check_branch
      %20 = sbr.rel (0) target = $region21
    $region20: #{sortpool_forward.3} parent=1 // pred_region
      _
    $region21: #{sortpool_forward.3} parent=1 // pred_fallthru
      _
    %v21 = vld [vmem:[%s0] sm:$0xf]
    %v22 = vld [vmem:[%s1] sm:$0xff]
    %v23 = vld [vmem:[%s1 + $0x8] sm:$0xff]
    %v24 = vld [vmem:[%s1 + $0x10] sm:$0xff]
    %v25 = vld [vmem:[%s1 + $0x18] sm:$0xff]
    %v26 = vld [vmem:[%s1 + $0x20] sm:$0xff]
    %v27 = vld [vmem:[%s1 + $0x28] sm:$0xff]
    %v28 = vld [vmem:[%s1 + $0x30] sm:$0xff]
    %v29 = vld [vmem:[%s1 + $0x38] sm:$0xff]
    %v30 = vld [vmem:[%s1 + $0x40] sm:$0xff]
    %v31 = vld [vmem:[%s1 + $0x48] sm:$0xff]
    %v32 = vld [vmem:[%s1 + $0x50] sm:$0xff]
    %v33 = vld [vmem:[%s1 + $0x58] sm:$0xff]
    %v34 = vld [vmem:[%s1 + $0x60] sm:$0xff]
    %v35 = vld [vmem:[%s1 + $0x68] sm:$0xff]
    %v36 = vld [vmem:[%s1 + $0x70] sm:$0xff]
    %v37 = vld [vmem:[%s1 + $0x78] sm:$0xff]
    %v38 = vld [vmem:[%s1 + $0x80] sm:$0xff]
    %v39 = vld [vmem:[%s1 + $0x88] sm:$0xff]
    %v40 = vld [vmem:[%s1 + $0x90] sm:$0xff]
    %v41 = vld [vmem:[%s1 + $0x98] sm:$0xff]
    %v42 = vld [vmem:[%s1 + $0xa0] sm:$0xff]
    %v43 = vld [vmem:[%s1 + $0xa8] sm:$0xff]
    %v44 = vld [vmem:[%s1 + $0xb0] sm:$0xff]
    %v45 = vld [vmem:[%s1 + $0xb8] sm:$0xff]
    %v46 = vld [vmem:[%s1 + $0xc0] sm:$0xff]
    %v47 = vld [vmem:[%s1 + $0xc8] sm:$0xff]
    %v48 = vld [vmem:[%s1 + $0xd0] sm:$0xff]
    %v49 = vld [vmem:[%s1 + $0xd8] sm:$0xff]
    %v50 = vld [vmem:[%s1 + $0xe0] sm:$0xff]
    %v51 = vld [vmem:[%s1 + $0xe8] sm:$0xff]
    %v52 = vld [vmem:[%s1 + $0xf0] sm:$0xff]
    %v53 = vld [vmem:[%s1 + $0xf8] sm:$0xff]
    %v54 = vld [vmem:[%s1 + $0x100] sm:$0xff]
    %v55 = vld [vmem:[%s1 + $0x108] sm:$0xff]
    %v56 = vld [vmem:[%s1 + $0x110] sm:$0xff]
    %v57 = vld [vmem:[%s1 + $0x118] sm:$0xff]
    %v58 = vld [vmem:[%s1 + $0x120] sm:$0xff]
    %v59 = vld [vmem:[%s1 + $0x128] sm:$0xff]
    %v60 = vld [vmem:[%s1 + $0x130] sm:$0xff]
    %v61 = vld [vmem:[%s1 + $0x138] sm:$0xff]
    %v62 = vld [vmem:[%s1 + $0x140] sm:$0xff]
    %v63 = vld [vmem:[%s1 + $0x148] sm:$0xff]
    %v64 = vld [vmem:[%s1 + $0x150] sm:$0xff]
    %v65 = vld [vmem:[%s1 + $0x158] sm:$0xff]
    %v66 = vld [vmem:[%s1 + $0x160] sm:$0xff]
    %v67 = vld [vmem:[%s1 + $0x168] sm:$0xff]
    %v68 = vld [vmem:[%s1 + $0x170] sm:$0xff]
    %v69 = vld [vmem:[%s1 + $0x178] sm:$0xff]
    %v70 = vld [vmem:[%s1 + $0x180] sm:$0xff]
    %v71 = vld [vmem:[%s1 + $0x188] sm:$0xff]
    %v72 = vld [vmem:[%s1 + $0x190] sm:$0xff]
    %v73 = vld [vmem:[%s1 + $0x198] sm:$0xff]
    %v74 = vld [vmem:[%s1 + $0x1a0] sm:$0xff]
    %v75 = vld [vmem:[%s1 + $0x1a8] sm:$0xff]
    %v76 = vld [vmem:[%s1 + $0x1b0] sm:$0xff]
    %v77 = vld [vmem:[%s1 + $0x1b8] sm:$0xff]
    %v78 = vld [vmem:[%s4] ss:$4 sm:$0x3]
    %v80 = vlaneseq
    %v81 = vshrl.u32 %v80, 7
    %v82 = vsub.s32 0, %v81
    %v83 = vrot.slane %v78, %v82
    %v84 = vlaneseq
    %v85 = vshrl.u32 %v84, 7
    %v86 = vsub.s32 1, %v85
    %v87 = vrot.slane %v78, %v86
    %v92 = vunpack.c.l.s4 1983009808
    %v93 = vunpack.c.0.s8 %v92
    %v94 = vlaneseq
    %v95 = vshrl.u32 %v94, 7
    %v96 = vsub.s32 %v93, %v95
    %v97 = vrot.slane %v21, %v96
    %v98 = vcombine.high %v97, %v97
    %vm100 = vcmask 785408
    %v101 = vsel %vm100, %v98, 0
    %103 = vmatprep.subr.mxu0 %v23
    %104 = vmatpush1.msra.mxu0 %v22
    %105 = vmatprep.subr.mxu0 %v25
    %106 = vmatpush1.msra.mxu0 %v24
    %107 = vmatprep.subr.mxu0 %v27
    %108 = vmatpush1.msra.mxu0 %v26
    %109 = vmatprep.subr.mxu0 %v29
    %110 = vmatpush1.msra.mxu0 %v28
    %111 = vmatprep.subr.mxu0 %v31
    %112 = vmatpush1.msra.mxu0 %v30
    %113 = vmatprep.subr.mxu0 %v33
    %114 = vmatpush1.msra.mxu0 %v32
    %115 = vmatprep.subr.mxu0 %v35
    %116 = vmatpush1.msra.mxu0 %v34
    %117 = vmatprep.subr.mxu0 %v37
    %118 = vmatpush1.msra.mxu0 %v36
    %119 = vmatprep.subr.mxu0 %v39
    %120 = vmatpush1.msra.mxu0 %v38
    %121 = vmatprep.subr.mxu0 %v41
    %122 = vmatpush1.msra.mxu0 %v40
    %123 = vmatprep.subr.mxu0 %v43
    %124 = vmatpush1.msra.mxu0 %v42
    %125 = vmatprep.subr.mxu0 %v45
    %126 = vmatpush1.msra.mxu0 %v44
    %127 = vmatprep.subr.mxu0 %v47
    %128 = vmatpush1.msra.mxu0 %v46
    %129 = vmatprep.subr.mxu0 %v49
    %130 = vmatpush1.msra.mxu0 %v48
    %131 = vmatprep.subr.mxu0 %v51
    %132 = vmatpush1.msra.mxu0 %v50
    %133 = vmatprep.subr.mxu0 %v53
    %134 = vmatpush1.msra.mxu0 %v52
    %135 = vmatprep.subr.mxu0 %v55
    %136 = vmatpush1.msra.mxu0 %v54
    %137 = vmatprep.subr.mxu0 %v57
    %138 = vmatpush1.msra.mxu0 %v56
    %139 = vmatprep.subr.mxu0 %v59
    %140 = vmatpush1.msra.mxu0 %v58
    %141 = vmatprep.subr.mxu0 %v61
    %142 = vmatpush1.msra.mxu0 %v60
    %143 = vmatprep.subr.mxu0 %v63
    %144 = vmatpush1.msra.mxu0 %v62
    %145 = vmatprep.subr.mxu0 %v65
    %146 = vmatpush1.msra.mxu0 %v64
    %147 = vmatprep.subr.mxu0 %v67
    %148 = vmatpush1.msra.mxu0 %v66
    %149 = vmatprep.subr.mxu0 %v69
    %150 = vmatpush1.msra.mxu0 %v68
    %151 = vmatprep.subr.mxu0 %v71
    %152 = vmatpush1.msra.mxu0 %v70
    %153 = vmatprep.subr.mxu0 %v73
    %154 = vmatpush1.msra.mxu0 %v72
    %155 = vmatprep.subr.mxu0 %v75
    %156 = vmatpush1.msra.mxu0 %v74
    %157 = vmatprep.subr.mxu0 %v77
    %158 = vmatpush1.msra.mxu0 %v76
    %159 = vmatprep.subr.mxu0 0.0
    %160 = vmatpush1.msra.mxu0 0.0
    %161 = vmatprep.subr.mxu0 0.0
    %162 = vmatpush1.msra.mxu0 0.0
    %163 = vmatprep.subr.mxu0 0.0
    %164 = vmatpush1.msra.mxu0 0.0
    %165 = vmatprep.subr.mxu0 0.0
    %166 = vmatpush1.msra.mxu0 0.0
    %167 = vmatprep.mubr.f32.mxu0 %v101
    %168 = vmatmul.mubr.f32.gmra.mrb[0].mxu0 %v97
    %v169 = vpop.f32.mrb[0].mxu0
    %v170 = vadd.f32 %v83, %v169
    %v171 = vpop.f32.mrb[0].mxu0
    %v172 = vadd.f32 %v87, %v171
    %173 = vdwg.mxu0
    %v174 = vmax.f32 %v170, 0.0
    %v175 = vmax.f32 %v172, 0.0
    %v176 = vld [vmem:[%s2] sm:$0xff]
    %v177 = vld [vmem:[%s2 + $0x8] sm:$0xff]
    %v178 = vld [vmem:[%s2 + $0x10] sm:$0xff]
    %v179 = vld [vmem:[%s2 + $0x18] sm:$0xff]
    %v180 = vld [vmem:[%s2 + $0x20] sm:$0xff]
    %v181 = vld [vmem:[%s2 + $0x28] sm:$0xff]
    %v182 = vld [vmem:[%s2 + $0x30] sm:$0xff]
    %v183 = vld [vmem:[%s2 + $0x38] sm:$0xff]
    %v184 = vld [vmem:[%s2 + $0x40] sm:$0xff]
    %v185 = vld [vmem:[%s2 + $0x48] sm:$0xff]
    %v186 = vld [vmem:[%s2 + $0x50] sm:$0xff]
    %v187 = vld [vmem:[%s2 + $0x58] sm:$0xff]
    %v188 = vld [vmem:[%s2 + $0x60] sm:$0xff]
    %v189 = vld [vmem:[%s2 + $0x68] sm:$0xff]
    %v190 = vld [vmem:[%s2 + $0x70] sm:$0xff]
    %v191 = vld [vmem:[%s2 + $0x78] sm:$0xff]
    %v192 = vld [vmem:[%s2 + $0x80] sm:$0xff]
    %v193 = vld [vmem:[%s2 + $0x88] sm:$0xff]
    %v194 = vld [vmem:[%s2 + $0x90] sm:$0xff]
    %v195 = vld [vmem:[%s2 + $0x98] sm:$0xff]
    %v196 = vld [vmem:[%s4 + $0x1] sm:$0x1]
    %v197 = vlaneseq
    %v198 = vshrl.u32 %v197, 7
    %v199 = vsub.s32 0, %v198
    %v200 = vrot.slane %v196, %v199
    %vm201 = vcmask 261120
    %v203 = vsel %vm201, %v175, 0
    %205 = vmatprep.subr.mxu0 0.0
    %206 = vmatpush1.msra.mxu0 %v176
    %207 = vmatprep.subr.mxu0 0.0
    %208 = vmatpush1.msra.mxu0 %v177
    %209 = vmatprep.subr.mxu0 0.0
    %210 = vmatpush1.msra.mxu0 %v178
    %211 = vmatprep.subr.mxu0 0.0
    %212 = vmatpush1.msra.mxu0 %v179
    %213 = vmatprep.subr.mxu0 0.0
    %214 = vmatpush1.msra.mxu0 %v180
    %215 = vmatprep.subr.mxu0 0.0
    %216 = vmatpush1.msra.mxu0 %v181
    %217 = vmatprep.subr.mxu0 0.0
    %218 = vmatpush1.msra.mxu0 %v182
    %219 = vmatprep.subr.mxu0 0.0
    %220 = vmatpush1.msra.mxu0 %v183
    %221 = vmatprep.subr.mxu0 0.0
    %222 = vmatpush1.msra.mxu0 %v184
    %223 = vmatprep.subr.mxu0 0.0
    %224 = vmatpush1.msra.mxu0 %v185
    %225 = vmatprep.subr.mxu0 0.0
    %226 = vmatpush1.msra.mxu0 %v186
    %227 = vmatprep.subr.mxu0 0.0
    %228 = vmatpush1.msra.mxu0 %v187
    %229 = vmatprep.subr.mxu0 0.0
    %230 = vmatpush1.msra.mxu0 %v188
    %231 = vmatprep.subr.mxu0 0.0
    %232 = vmatpush1.msra.mxu0 %v189
    %233 = vmatprep.subr.mxu0 0.0
    %234 = vmatpush1.msra.mxu0 %v190
    %235 = vmatprep.subr.mxu0 0.0
    %236 = vmatpush1.msra.mxu0 %v191
    %237 = vmatprep.subr.mxu0 0.0
    %238 = vmatpush1.msra.mxu0 %v192
    %239 = vmatprep.subr.mxu0 0.0
    %240 = vmatpush1.msra.mxu0 %v193
    %241 = vmatprep.subr.mxu0 0.0
    %242 = vmatpush1.msra.mxu0 %v194
    %243 = vmatprep.subr.mxu0 0.0
    %244 = vmatpush1.msra.mxu0 %v195
    %245 = vmatprep.subr.mxu0 0.0
    %246 = vmatpush1.msra.mxu0 0.0
    %247 = vmatprep.subr.mxu0 0.0
    %248 = vmatpush1.msra.mxu0 0.0
    %249 = vmatprep.subr.mxu0 0.0
    %250 = vmatpush1.msra.mxu0 0.0
    %251 = vmatprep.subr.mxu0 0.0
    %252 = vmatpush1.msra.mxu0 0.0
    %253 = vmatprep.subr.mxu0 0.0
    %254 = vmatpush1.msra.mxu0 0.0
    %255 = vmatprep.subr.mxu0 0.0
    %256 = vmatpush1.msra.mxu0 0.0
    %257 = vmatprep.subr.mxu0 0.0
    %258 = vmatpush1.msra.mxu0 0.0
    %259 = vmatprep.subr.mxu0 0.0
    %260 = vmatpush1.msra.mxu0 0.0
    %261 = vmatprep.subr.mxu0 0.0
    %262 = vmatpush1.msra.mxu0 0.0
    %263 = vmatprep.subr.mxu0 0.0
    %264 = vmatpush1.msra.mxu0 0.0
    %265 = vmatprep.subr.mxu0 0.0
    %266 = vmatpush1.msra.mxu0 0.0
    %267 = vmatprep.subr.mxu0 0.0
    %268 = vmatpush1.msra.mxu0 0.0
    %269 = vmatprep.mubr.f32.mxu0 %v203
    %270 = vmatmul.mubr.f32.gmra.mrb[0].mxu0 %v174
    %v271 = vpop.f32.mrb[0].mxu0
    %v272 = vadd.f32 %v200, %v271
    %v273 = vpop.f32.mrb[0].mxu0
    %274 = vdwg.mxu0
    %v275 = vmax.f32 %v272, 0.0
    %v276 = vld [vmem:[%s3] sm:$0xff]
    %v277 = vld [vmem:[%s3 + $0x8] sm:$0xff]
    %v278 = vld [vmem:[%s3 + $0x10] sm:$0xff]
    %v279 = vld [vmem:[%s3 + $0x18] sm:$0xff]
    %v280 = vld [vmem:[%s4 + $0x2] sm:$0x1]
    %v281 = vlaneseq
    %v282 = vshrl.u32 %v281, 7
    %v283 = vsub.s32 0, %v282
    %v284 = vrot.slane %v280, %v283
    %v286 = vsel %vm201, %v275, 0
    %288 = vmatprep.subr.mxu0 0.0
    %289 = vmatpush1.msra.mxu0 %v276
    %290 = vmatprep.subr.mxu0 0.0
    %291 = vmatpush1.msra.mxu0 %v277
    %292 = vmatprep.subr.mxu0 0.0
    %293 = vmatpush1.msra.mxu0 %v278
    %294 = vmatprep.subr.mxu0 0.0
    %295 = vmatpush1.msra.mxu0 %v279
    %296 = vmatprep.subr.mxu0 0.0
    %297 = vmatpush1.msra.mxu0 0.0
    %298 = vmatprep.subr.mxu0 0.0
    %299 = vmatpush1.msra.mxu0 0.0
    %300 = vmatprep.subr.mxu0 0.0
    %301 = vmatpush1.msra.mxu0 0.0
    %302 = vmatprep.subr.mxu0 0.0
    %303 = vmatpush1.msra.mxu0 0.0
    %304 = vmatprep.subr.mxu0 0.0
    %305 = vmatpush1.msra.mxu0 0.0
    %306 = vmatprep.subr.mxu0 0.0
    %307 = vmatpush1.msra.mxu0 0.0
    %308 = vmatprep.subr.mxu0 0.0
    %309 = vmatpush1.msra.mxu0 0.0
    %310 = vmatprep.subr.mxu0 0.0
    %311 = vmatpush1.msra.mxu0 0.0
    %312 = vmatprep.subr.mxu0 0.0
    %313 = vmatpush1.msra.mxu0 0.0
    %314 = vmatprep.subr.mxu0 0.0
    %315 = vmatpush1.msra.mxu0 0.0
    %316 = vmatprep.subr.mxu0 0.0
    %317 = vmatpush1.msra.mxu0 0.0
    %318 = vmatprep.subr.mxu0 0.0
    %319 = vmatpush1.msra.mxu0 0.0
    %320 = vmatprep.subr.mxu0 0.0
    %321 = vmatpush1.msra.mxu0 0.0
    %322 = vmatprep.subr.mxu0 0.0
    %323 = vmatpush1.msra.mxu0 0.0
    %324 = vmatprep.subr.mxu0 0.0
    %325 = vmatpush1.msra.mxu0 0.0
    %326 = vmatprep.subr.mxu0 0.0
    %327 = vmatpush1.msra.mxu0 0.0
    %328 = vmatprep.subr.mxu0 0.0
    %329 = vmatpush1.msra.mxu0 0.0
    %330 = vmatprep.subr.mxu0 0.0
    %331 = vmatpush1.msra.mxu0 0.0
    %332 = vmatprep.subr.mxu0 0.0
    %333 = vmatpush1.msra.mxu0 0.0
    %334 = vmatprep.subr.mxu0 0.0
    %335 = vmatpush1.msra.mxu0 0.0
    %336 = vmatprep.subr.mxu0 0.0
    %337 = vmatpush1.msra.mxu0 0.0
    %338 = vmatprep.subr.mxu0 0.0
    %339 = vmatpush1.msra.mxu0 0.0
    %340 = vmatprep.subr.mxu0 0.0
    %341 = vmatpush1.msra.mxu0 0.0
    %342 = vmatprep.subr.mxu0 0.0
    %343 = vmatpush1.msra.mxu0 0.0
    %344 = vmatprep.subr.mxu0 0.0
    %345 = vmatpush1.msra.mxu0 0.0
    %346 = vmatprep.subr.mxu0 0.0
    %347 = vmatpush1.msra.mxu0 0.0
    %348 = vmatprep.subr.mxu0 0.0
    %349 = vmatpush1.msra.mxu0 0.0
    %350 = vmatprep.subr.mxu0 0.0
    %351 = vmatpush1.msra.mxu0 0.0
    %352 = vmatprep.mubr.f32.mxu0 0.0
    %353 = vmatmul.mubr.f32.gmra.mrb[0].mxu0 %v286
    %v354 = vpop.f32.mrb[0].mxu0
    %v355 = vadd.f32 %v284, %v354
    %v356 = vpop.f32.mrb[0].mxu0
    %357 = vdwg.mxu0
    %vm358 = vcmask 33792
    %v359 = vsel %vm358, %v355, -inf
    %360 = vmax.xlane.f32.xlu0 %v359
    %v361 = vpop.xlane.xlu0 %360
    %v362 = vsub.f32 %v355, %v361
    %v363 = vmul.f32 %v362, 1.442695
    %v364 = vpow.pop %v363
    %v365 = vsel %vm358, %v364, 0.0
    %366 = vadd.xlane.f32.xlu0 %v365
    %v367 = vpop.xlane.xlu0 %366
    %v368 = vlog2.pop %v367
    %v369 = vmul.f32 %v368, 0.6931472
    %v370 = vsub.f32 %v362, %v369
    %371 = vst.msk [vmem:[#allocation2] sm:$0x3] %vm358, %v370
    // Predicated region
    $region22: #{sortpool_forward.3} parent=1 // pred_check
      _
    $region23: #{sortpool_forward.3} parent=1 // pred_check_branch
      %373 = sbr.rel (0) target = $region25
    $region24: #{sortpool_forward.3} parent=1 // pred_region
      %s375 = ssub.s32 32, 32
      %376 = vsyncadd [#allocation3], %s375
      %s378 = sshll.u32 [#allocation2], 4
      %s379 = int_to_ptr.vmem [resolvable:$true] %s378
      %381 = dma.vmem_to_hbm [thread:$0]  %s379, 32, %s5, [#allocation3]
    $region25: #{sortpool_forward.3} parent=1 // pred_fallthru
      _
    // Predicated region
    $region26: #{sortpool_forward.3} parent=1 // pred_check
      _
    $region27: #{sortpool_forward.3} parent=1 // pred_check_branch
      %383 = sbr.rel (0) target = $region29
    $region28: #{sortpool_forward.3} parent=1 // pred_region
      %384 = dma.done [#allocation3], 32
    $region29: #{sortpool_forward.3} parent=1 // pred_fallthru
      _
    %385 = vsyncpa [#allocation3], 1

</llo_original>
